<compile_context>
chip_gen: v5e
topology: v5e:2x2
jax: 0.10.0
libtpu: 0.0.40
codegen_flags: <defaults>
</compile_context>

<pallas_src>
import functools
import math

import jax
import jax.numpy as jnp
from jax import lax
from jax.experimental import pallas as pl
from jax.experimental.pallas import tpu as pltpu


def _cdiv(a: int, b: int) -> int:
    return (a + b - 1) // b


def _round_up(x: int, m: int) -> int:
    return (x + m - 1) // m * m


def _yuan_rope_table_kernel(offset_ref, inv_ref, lanepos_ref, *out_refs, pack, outputs):
    """Writes packed rotary tables for one tile of packed rows.

    offset_ref : SMEM (1,)   int32   scalar-prefetched position offset
    inv_ref    : VMEM (1, W) float32 [inv_freq, inv_freq] tiled `pack` times along lanes
    lanepos_ref: VMEM (1, W) float32 per-lane packed-slot index (lane // dim), host-precomputed
    out_refs   : VMEM (R, W) float32, one per entry of `outputs` ("cos" | "sin" | "ang");
                 each row holds `pack` consecutive positions (lane-dense, W % 128 == 0).
    """
    R, W = out_refs[0].shape
    # Exact int32 position of lane-slot 0 of each row in this tile.
    base = pl.program_id(0) * (R * pack) + offset_ref[0]
    row = lax.broadcasted_iota(jnp.int32, (R, W), 0)
    # pos = base + row*pack + lane//dim.  Both addends are exact integers in f32, so the
    # summed position (and hence the angle rounding) matches the reference bit-for-bit
    # for positions < 2^24.  The lane//dim term is precomputed host-side -- no integer
    # divide and no second iota in the kernel.
    pos = (base + row * pack).astype(jnp.float32) + lanepos_ref[...]
    ang = pos * inv_ref[...]
    for name, ref in zip(outputs, out_refs):
        if name == "cos":
            ref[...] = jnp.cos(ang)  # transcendental slot is idle here: free filler
        elif name == "sin":
            ref[...] = jnp.sin(ang)
        else:  # "ang": raw angles, torch-layout compatibility / verification only
            ref[...] = ang


class YuanRotaryEmbedding:
    """Rotary cos/sin table producer matching the torch YuanRotaryEmbedding.

    Hot path: cos_sin_packed(max_seq_len, offset) -> two lane-dense packed slabs of
    shape (rows_padded, pack*dim) float32.  unpack()/__call__ reproduce the torch
    [S, 1, dim] layout for compatibility and tests only (a layout-only pass that is
    deliberately kept off the serving path).
    """

    def __init__(self, dim, base=10000, target_tile_bytes=1 << 20):
        assert dim % 2 == 0, "rotary dim must be even"
        self.dim = dim
        self.base = base
        self.target_tile_bytes = target_tile_bytes  # ~1 MiB tiles: 2048 rows at width 128

        # Smallest pack such that pack*dim is a multiple of 128 -> unmasked full-lane
        # stores for any head dim, no padded lanes.
        g = math.gcd(dim, 128)
        self.pack = 128 // g
        self.width = self.pack * dim

        # inv_freq = 1 / base ** (arange(0, dim, 2) / dim)
        inv_freq = 1.0 / (base ** (jnp.arange(0, dim, 2, dtype=jnp.float32) / dim))
        self.inv_freq = inv_freq.astype(jnp.float32)
        inv_full = jnp.concatenate([self.inv_freq, self.inv_freq])          # (dim,)
        self.inv_row = jnp.tile(inv_full, self.pack).reshape(1, self.width)  # (1, W)
        # Per-lane packed-slot index (lane // dim) as exact small floats.
        lane_slot = (jnp.arange(self.width, dtype=jnp.int32) // dim).astype(jnp.float32)
        self.lanepos_row = lane_slot.reshape(1, self.width)                  # (1, W)

        self._builders = {}        # (max_seq_len, outputs) -> jitted pallas builder
        self._fuse_cos_sin = True  # flips off only if in-kernel sin/cos fails to lower

    # ---- geometry: packed-row tiling ----------------------------------------------
    def _geometry(self, max_seq_len):
        rows = _cdiv(max_seq_len, self.pack)          # packed rows actually needed
        rows8 = _round_up(rows, 8)
        bytes_per_row = self.width * 4
        max_tile_rows = max(8, (self.target_tile_bytes // bytes_per_row) // 8 * 8)
        grid_n = max(1, _cdiv(rows8, max_tile_rows))
        if rows8 > 8:
            # Keep the grid >= 2 and even so v7x shards row tiles across both
            # TensorCores; on single-TC v5e/v6e the extra step costs ~0.35us.
            grid_n = max(2, grid_n)
            grid_n += grid_n % 2
        tile_r = _round_up(_cdiv(rows8, grid_n), 8)
        rows_padded = tile_r * grid_n                  # trailing padded rows are harmless
        return tile_r, grid_n, rows_padded

    # ---- compiled builder cache (keyed by max_seq_len only; offset is traced) -------
    def _get_builder(self, max_seq_len, outputs):
        key = (int(max_seq_len), tuple(outputs))
        builder = self._builders.get(key)
        if builder is not None:
            return builder

        tile_r, grid_n, rows_padded = self._geometry(int(max_seq_len))
        width = self.width
        n_out = len(outputs)

        kernel = functools.partial(
            _yuan_rope_table_kernel, pack=self.pack, outputs=tuple(outputs))
        row_spec = pl.BlockSpec((1, width), lambda i, off: (0, 0))
        out_spec = pl.BlockSpec((tile_r, width), lambda i, off: (i, 0))

        call = pl.pallas_call(
            kernel,
            out_shape=tuple(
                jax.ShapeDtypeStruct((rows_padded, width), jnp.float32)
                for _ in range(n_out)
            ),
            grid_spec=pltpu.PrefetchScalarGridSpec(
                num_scalar_prefetch=1,                 # offset -> SMEM, traced
                grid=(grid_n,),
                in_specs=[row_spec, row_spec],
                out_specs=tuple([out_spec] * n_out),
            ),
            compiler_params=pltpu.CompilerParams(
                dimension_semantics=("parallel",),     # row tiles are independent
                vmem_limit_bytes=32 * 1024 * 1024,
            ),
        )

        builder = jax.jit(lambda off, inv_row, lanepos_row: call(off, inv_row, lanepos_row))
        self._builders[key] = builder
        return builder

    # ---- public API ------------------------------------------------------------------
    def packed_tables(self, max_seq_len, offset=0, outputs=("cos", "sin")):
        builder = self._get_builder(max_seq_len, outputs)
        off = jnp.asarray([offset], dtype=jnp.int32)   # traced: new offsets reuse the compile
        return builder(off, self.inv_row, self.lanepos_row)

    def cos_sin_packed(self, max_seq_len, offset=0):
        """Hot path: fused cos/sin packed slabs, no relayout, no per-offset recompile."""
        if self._fuse_cos_sin:
            try:
                return self.packed_tables(max_seq_len, offset, ("cos", "sin"))
            except Exception:
                # TODO(synk): drop this fallback once in-kernel sin/cos lowering is
                # confirmed on every deployment target; the angle table is still
                # produced by the Pallas kernel, only cos/sin move outside.
                self._fuse_cos_sin = False
        (ang,) = self.packed_tables(max_seq_len, offset, ("ang",))
        return jnp.cos(ang), jnp.sin(ang)

    def unpack(self, packed, max_seq_len):
        """Packed (rows, pack*dim) slab -> torch-layout [S, 1, dim].

        Layout-only pass for compatibility/verification; consumers should read the
        packed slab directly instead of calling this on the serving path.
        """
        rows_padded = packed.shape[0]
        flat = packed.reshape(rows_padded * self.pack, self.dim)[:max_seq_len]
        return flat[:, None, :]

    def cos_sin(self, max_seq_len, offset=0):
        cos_p, sin_p = self.cos_sin_packed(max_seq_len, offset)
        return self.unpack(cos_p, max_seq_len), self.unpack(sin_p, max_seq_len)

    def __call__(self, x, max_seq_len, offset=0):
        """torch-compatible API: raw angle table [max_seq_len, 1, dim] (float32)."""
        del x  # only a device/dtype carrier in the torch module
        (ang_p,) = self.packed_tables(max_seq_len, offset, ("ang",))
        return self.unpack(ang_p, max_seq_len)


if __name__ == "__main__":
    key = jax.random.PRNGKey(0)
    batch, seq, hidden = 2, 8, 32

    # x only supplies device/dtype in the torch module.
    x = jax.random.normal(key, (batch, seq, hidden), dtype=jnp.float32)

    rope = YuanRotaryEmbedding(dim=hidden, base=10000)

    # --- small case: torch-compatible angle table + fused cos/sin -------------------
    emb = rope(x, max_seq_len=seq, offset=0)            # [S, 1, dim] raw angles
    cos_u, sin_u = rope.cos_sin(seq, offset=0)          # fused kernel, unpacked for checking
    emb, cos_u, sin_u = jax.block_until_ready((emb, cos_u, sin_u))

    seq_ids = jnp.arange(seq, dtype=jnp.float32)
    freqs_ref = seq_ids[:, None] * rope.inv_freq[None, :]
    emb_ref = jnp.concatenate([freqs_ref, freqs_ref], axis=-1)[:, None, :]
    assert emb.shape == (seq, 1, hidden) and emb.dtype == jnp.float32
    assert jnp.allclose(emb, emb_ref, atol=1e-6, rtol=1e-6)
    assert cos_u.shape == sin_u.shape == (seq, 1, hidden)
    assert jnp.allclose(cos_u, jnp.cos(emb_ref), atol=1e-4, rtol=1e-5)
    assert jnp.allclose(sin_u, jnp.sin(emb_ref), atol=1e-4, rtol=1e-5)

    # --- large case: row-tiled grid (even, >= 2 tiles), nonzero offset, packed path --
    S2, off2 = 16384, 7
    cos_p, sin_p = rope.cos_sin_packed(S2, offset=off2)              # packed (rows, 128)
    (ang_p,) = rope.packed_tables(S2, offset=off2, outputs=("ang",))
    cos_p, sin_p, ang_p = jax.block_until_ready((cos_p, sin_p, ang_p))

    seq2 = jnp.arange(S2, dtype=jnp.float32) + float(off2)
    f2 = seq2[:, None] * rope.inv_freq[None, :]
    ref2 = jnp.concatenate([f2, f2], axis=-1)[:, None, :]
    ang_u = rope.unpack(ang_p, S2)
    assert ang_u.shape == (S2, 1, hidden)
    assert jnp.allclose(ang_u, ref2, atol=1e-6, rtol=1e-6)           # positions are int-exact
    # cos/sin checked in the packed layout (no relayout needed); loose tolerance only
    # because large-angle argument reduction may differ slightly between the in-kernel
    # and the XLA transcendental implementations.
    assert cos_p.shape == sin_p.shape == ang_p.shape
    assert jnp.allclose(cos_p, jnp.cos(ang_p), atol=2e-2, rtol=0)
    assert jnp.allclose(sin_p, jnp.sin(ang_p), atol=2e-2, rtol=0)

    # offset is traced (scalar-prefetched): a new offset reuses the same compiled kernel.
    cos_p2, _ = rope.cos_sin_packed(S2, offset=off2 + 1)
    jax.block_until_ready(cos_p2)

    print("KERNEL_OK")
</pallas_src>

<mosaic_0001>
module attributes {stable_mosaic.version = 11 : i64} {
  func.func @_yuan_rope_table_kernel(%arg0: i32, %arg1: memref<1xi32, #tpu.memory_space<smem>>, %arg2: memref<1x128xf32, #tpu.memory_space<vmem>>, %arg3: memref<1x128xf32, #tpu.memory_space<vmem>>, %arg4: memref<8x128xf32, #tpu.memory_space<vmem>>) attributes {dimension_semantics = [#tpu.dimension_semantics<parallel>], iteration_bounds = array<i64: 1>, scalar_prefetch = 1 : i64, scratch_operands = 0 : i64, tpu.core_type = #tpu.core_type<tc>, window_params = [{pipeline_mode = #tpu.pipeline_mode<synchronous>, transform_indices = @transform_0, window_bounds = array<i64: 1, 128>}, {pipeline_mode = #tpu.pipeline_mode<synchronous>, transform_indices = @transform_1, window_bounds = array<i64: 1, 128>}, {transform_indices = @transform_2, window_bounds = array<i64: 8, 128>}]} {
    %c32_i32 = arith.constant 32 : i32
    %0 = arith.muli %arg0, %c32_i32 : i32
    %c0 = arith.constant 0 : index
    %1 = memref.load %arg1[%c0] : memref<1xi32, #tpu.memory_space<smem>>
    %2 = arith.addi %0, %1 : i32
    %3 = tpu.iota {dimensions = array<i32: 0>} : vector<8x128xi32>
    %c4_i32 = arith.constant 4 : i32
    %4 = vector.broadcast %c4_i32 : i32 to vector<8x128xi32>
    %5 = arith.muli %3, %4 : vector<8x128xi32>
    %6 = vector.broadcast %2 : i32 to vector<8x128xi32>
    %7 = arith.addi %6, %5 : vector<8x128xi32>
    %8 = arith.sitofp %7 : vector<8x128xi32> to vector<8x128xf32>
    %c0_0 = arith.constant 0 : index
    %c0_1 = arith.constant 0 : index
    %9 = vector.load %arg3[%c0_0, %c0_1] : memref<1x128xf32, #tpu.memory_space<vmem>>, vector<1x128xf32>
    %10 = vector.broadcast %9 : vector<1x128xf32> to vector<8x128xf32>
    %11 = arith.addf %8, %10 : vector<8x128xf32>
    %c0_2 = arith.constant 0 : index
    %c0_3 = arith.constant 0 : index
    %12 = vector.load %arg2[%c0_2, %c0_3] : memref<1x128xf32, #tpu.memory_space<vmem>>, vector<1x128xf32>
    %13 = vector.broadcast %12 : vector<1x128xf32> to vector<8x128xf32>
    %14 = arith.mulf %11, %13 : vector<8x128xf32>
    %c0_4 = arith.constant 0 : index
    %c0_5 = arith.constant 0 : index
    %15 = vector.load %arg4[%c0_4, %c0_5] : memref<8x128xf32, #tpu.memory_space<vmem>>, vector<8x128xf32>
    tpu.vector_store %arg4[%c0_4, %c0_5], %14 {strides = array<i32>} : memref<8x128xf32, #tpu.memory_space<vmem>>, vector<8x128xf32>,
    return
  }
  func.func @transform_0(%arg0: i32, %arg1: memref<1xi32, #tpu.memory_space<smem>>) -> (i32, i32) {
    %c0_i32 = arith.constant 0 : i32
    %c0_i32_0 = arith.constant 0 : i32
    %c0_i32_1 = arith.constant 0 : i32
    return %c0_i32, %c0_i32_0 : i32, i32
  }
  func.func @transform_1(%arg0: i32, %arg1: memref<1xi32, #tpu.memory_space<smem>>) -> (i32, i32) {
    %c0_i32 = arith.constant 0 : i32
    %c0_i32_0 = arith.constant 0 : i32
    %c0_i32_1 = arith.constant 0 : i32
    return %c0_i32, %c0_i32_0 : i32, i32
  }
  func.func @transform_2(%arg0: i32, %arg1: memref<1xi32, #tpu.memory_space<smem>>) -> (i32, i32) {
    %c0_i32 = arith.constant 0 : i32
    %c0_i32_0 = arith.constant 0 : i32
    return %arg0, %c0_i32 : i32, i32
  }
}

</mosaic_0001>

<llo_original>
// kernel: _lambda_.1
$region0: #{_lambda_.1}
  #allocation0 [shape = 'u32[]', space=smem, size = 0x4, offset = 0x4, fixed_abs, tag = 'smem constant byte address 0x4 - core index']
  #allocation1 [shape = 'u32[72,128]{1,0:T(1,128)}', space=vmem, size = 0x9000, scoped, tag = 'internal scratch']
  #allocation2 [shape = 's32[1]{0}', space=sflag, size = 0x4, scoped, tag = 'scoped memory for _lambda_.1']
  #allocation3 [shape = 's32[1]{0:T(128)S(6)}', space=smem, size = 0x200, scoped, tag = 'prefetched SMEM operand 0']
  %s0 = inlined_call_operand.<no memory space> [shape: s32[1], index: 0, kind: input, shape index: {}]
  %s1 = inlined_call_operand.vmem [shape: f32[1,128], index: 1, kind: input, shape index: {}]
  %s2 = inlined_call_operand.vmem [shape: f32[1,128], index: 2, kind: input, shape index: {}]
  %s3 = inlined_call_operand.hbm [shape: f32[8,128], index: 3, kind: output, shape index: {}]
  %s4 = sld [smem:[#allocation0]]
  $region18: #{_lambda_.1} parent=0
    _
  %s6 = ssub.s32 1, %s4
  %s7 = scalar_select 0, %s6, %s4
  %8 = sst [smem:[#allocation3]] %s0
  $region1: #{_lambda_.1} parent=0
    #allocation4 [shape = 'u8[4096]{0}', space=vmem, size = 0x1000, scoped, tag = 'output window, operand 0, single buffered']
    #allocation5 [shape = 's32[1]{0}', space=sflag, size = 0x4, scoped, tag = 'scoped memory for _lambda_.1']
    %9 = vsyncpa [#allocation5], 0
    // Predicated region
    $region2: #{_lambda_.1} parent=1 // pred_check
      _
    $region3: #{_lambda_.1} parent=1 // pred_check_branch
      %11 = sbr.rel (0) target = $region5
    $region4: #{_lambda_.1} parent=1 // pred_region
      _
    $region5: #{_lambda_.1} parent=1 // pred_fallthru
      _
    // Predicated region
    $region6: #{_lambda_.1} parent=1 // pred_check
      _
    $region7: #{_lambda_.1} parent=1 // pred_check_branch
      %13 = sbr.rel (0) target = $region9
    $region8: #{_lambda_.1} parent=1 // pred_region
      _
    $region9: #{_lambda_.1} parent=1 // pred_fallthru
      _
    %s14 = smul.u32 0, 32
    %s15 = sld [smem:[#allocation3]]
    %s16 = sadd.s32 %s14, %s15
    %v17 = vlaneseq
    %v18 = vshrl.u32 %v17, 7
    %v19 = vmul.u32 %v18, 4
    %v20 = vstv %s16
    %v21 = vadd.s32 %v20, %v19
    %v22 = vcvt.s32.f32 %v21
    %v23 = vld [vmem:[%s2] sm:$0x1]
    %v25 = vperm.slane %v23, 0
    %v27 = vadd.f32 %v22, %v25
    %v28 = vld [vmem:[%s1] sm:$0x1]
    %v30 = vperm.slane %v28, 0
    %v32 = vmul.f32 %v27, %v30
    %33 = vst [vmem:[#allocation4] sm:$0xff] %v32
    // Predicated region
    $region10: #{_lambda_.1} parent=1 // pred_check
      _
    $region11: #{_lambda_.1} parent=1 // pred_check_branch
      %35 = sbr.rel (0) target = $region13
    $region12: #{_lambda_.1} parent=1 // pred_region
      %37 = vsyncadd [#allocation5], 0
      %s39 = sshll.u32 [#allocation4], 4
      %s40 = int_to_ptr.vmem [resolvable:$true] %s39
      %s41 = sshll.u32 %s3, 4
      %s42 = int_to_ptr.hbm [resolvable:$true] %s41
      %44 = dma.vmem_to_hbm [thread:$0]  %s40, 128, %s42, [#allocation5]
    $region13: #{_lambda_.1} parent=1 // pred_fallthru
      _
    // Predicated region
    $region14: #{_lambda_.1} parent=1 // pred_check
      _
    $region15: #{_lambda_.1} parent=1 // pred_check_branch
      %46 = sbr.rel (0) target = $region17
    $region16: #{_lambda_.1} parent=1 // pred_region
      %48 = dma.done [#allocation5], 128
    $region17: #{_lambda_.1} parent=1 // pred_fallthru
      _
    %49 = vsyncpa [#allocation5], 1

</llo_original>
